<compile_context>
chip_gen: v7x
topology: tpu7x:2x2x1
jax: 0.10.0
libtpu: 0.0.40
codegen_flags: <defaults>
</compile_context>

<pallas_src>
import functools
import math

import jax
import jax.numpy as jnp
from jax.experimental import pallas as pl
from jax.experimental.pallas import tpu as pltpu

VAR = 0.05                       # skimage random_noise default used by the module
SIGMA = math.sqrt(VAR)
SP_AMOUNT = 0.05                 # skimage 's&p' default amount
SALT_VS_PEPPER = 0.5
P_SALT = SP_AMOUNT * SALT_VS_PEPPER   # u < P_SALT            -> salt (1.0)
                                      # P_SALT <= u < AMOUNT  -> pepper (0.0)

LANE = 512                       # lane-dense last dim (multiple of 128)
MAX_TILE_ROWS = 1024             # (1024, 512) f32 = 2 MiB per block buffer


def _normalize(scale_ref, x_ref):
    """(x - mn) * inv_range, computed in f32 regardless of input dtype."""
    mn = scale_ref[0]
    inv = scale_ref[1]
    x = x_ref[...].astype(jnp.float32)
    return (x - mn) * inv


def _identity_kernel(scale_ref, x_ref, o_ref):
    # aug_index == 0: normalized image * 255
    o_ref[...] = _normalize(scale_ref, x_ref) * jnp.float32(255.0)


def _noise_kernel(scale_ref, x_ref, noise_ref, o_ref, *, aug_index):
    xn = _normalize(scale_ref, x_ref)
    if aug_index == 1:
        # gaussian: x + sigma * N(0, 1), clip [0, 1]
        y = jnp.clip(xn + jnp.float32(SIGMA) * noise_ref[...], 0.0, 1.0)
    elif aug_index == 2:
        # speckle: x + x * sigma * N(0, 1)  ==  x * (1 + sigma * N), clip [0, 1]
        y = jnp.clip(xn * (jnp.float32(1.0) + jnp.float32(SIGMA) * noise_ref[...]),
                     0.0, 1.0)
    elif aug_index == 3:
        # salt & pepper from a single uniform draw with two thresholds.
        # TODO(synk): skimage picks an exact count of coordinates; this uses
        # per-pixel Bernoulli draws (expected flipped fraction == amount).
        u = noise_ref[...]
        y = jnp.where(u < jnp.float32(P_SALT), jnp.float32(1.0),
                      jnp.where(u < jnp.float32(SP_AMOUNT), jnp.float32(0.0), xn))
    else:
        raise ValueError(f"invalid aug_index {aug_index}")
    o_ref[...] = y * jnp.float32(255.0)


def gaussian_noise_forward(img, aug_index, key=None):
    """img: (1, C, H, W) array. Returns (1, C, H, W) float32."""
    if aug_index is None:
        print("please provide aug_index")
        return None
    assert img.shape[0] == 1, "module squeezes a leading batch dim of size 1"
    _, C, H, W = img.shape
    aug_index = int(aug_index)

    # --- hoisted global min/max (XLA reduction), constant-image guard ------
    mn = jnp.min(img).astype(jnp.float32)
    mx = jnp.max(img).astype(jnp.float32)
    inv = jnp.float32(1.0) / jnp.maximum(mx - mn, jnp.float32(1e-12))
    scale = jnp.stack([mn, inv]).astype(jnp.float32)          # SMEM (2,)

    # --- lane-dense flattening + row tiling --------------------------------
    total = C * H * W
    r0 = pl.cdiv(total, LANE)
    tile_rows = min(MAX_TILE_ROWS, r0)                        # full dim if small
    rows = pl.cdiv(r0, tile_rows) * tile_rows                 # exact tiling
    pad_total = rows * LANE
    grid = rows // tile_rows

    flat = img.reshape(-1)                                    # native dtype (no upcast)
    if pad_total > total:
        flat = jnp.concatenate(
            [flat, jnp.zeros((pad_total - total,), dtype=flat.dtype)])
    x2d = flat.reshape(rows, LANE)

    block = pl.BlockSpec((tile_rows, LANE), lambda i: (i, 0))
    scale_spec = pl.BlockSpec(memory_space=pltpu.MemorySpace.SMEM)
    cparams = pltpu.CompilerParams(dimension_semantics=("parallel",))
    out_shape = jax.ShapeDtypeStruct((rows, LANE), jnp.float32)

    if aug_index == 0:
        out2d = pl.pallas_call(
            _identity_kernel,
            out_shape=out_shape,
            grid=(grid,),
            in_specs=[scale_spec, block],
            out_specs=block,
            compiler_params=cparams,
        )(scale, x2d)
    elif aug_index in (1, 2, 3):
        if key is None:
            key = jax.random.PRNGKey(0)
        if aug_index == 3:
            noise = jax.random.uniform(key, (rows, LANE), dtype=jnp.float32)
        else:
            noise = jax.random.normal(key, (rows, LANE), dtype=jnp.float32)
        kernel = functools.partial(_noise_kernel, aug_index=aug_index)
        out2d = pl.pallas_call(
            kernel,
            out_shape=out_shape,
            grid=(grid,),
            in_specs=[scale_spec, block, block],
            out_specs=block,
            compiler_params=cparams,
        )(scale, x2d, noise)
    else:
        raise ValueError(f"invalid aug_index {aug_index}")

    return out2d.reshape(-1)[:total].reshape(1, C, H, W)


if __name__ == "__main__":
    key = jax.random.PRNGKey(0)
    # small NCHW input consistent with the module's expected (1, C, H, W) image
    x = jax.random.uniform(key, (1, 4, 16, 16), dtype=jnp.float32) * 3.0 - 1.0

    outs = []
    for aug_index in (0, 1, 2, 3):
        k = jax.random.fold_in(key, aug_index)
        out = gaussian_noise_forward(x, aug_index, key=k)
        out = jax.block_until_ready(out)
        assert out.shape == (1, 4, 16, 16)
        assert out.dtype == jnp.float32
        outs.append(out)

    # sanity: aug_index == 0 is exactly 255 * normalized input
    xn = (x - x.min()) / (x.max() - x.min())
    assert jnp.allclose(outs[0], xn * 255.0, atol=1e-3)
    # noisy variants stay within the clipped [0, 255] range
    for o in outs[1:]:
        assert float(o.min()) >= 0.0 and float(o.max()) <= 255.0

    print("KERNEL_OK")
</pallas_src>

<mosaic_0001>
module attributes {stable_mosaic.version = 11 : i64} {
  func.func @_identity_kernel(%arg0: i32, %arg1: memref<2xf32, #tpu.memory_space<smem>>, %arg2: memref<2x512xf32, #tpu.memory_space<vmem>>, %arg3: memref<2x512xf32, #tpu.memory_space<vmem>>) attributes {dimension_semantics = [#tpu.dimension_semantics<parallel>], iteration_bounds = array<i64: 1>, scalar_prefetch = 0 : i64, scratch_operands = 0 : i64, tpu.core_type = #tpu.core_type<tc>, window_params = [{transform_indices = @transform_0, window_bounds = array<i64: 2>}, {transform_indices = @transform_1, window_bounds = array<i64: 2, 512>}, {transform_indices = @transform_2, window_bounds = array<i64: 2, 512>}]} {
    %c0 = arith.constant 0 : index
    %0 = memref.load %arg1[%c0] : memref<2xf32, #tpu.memory_space<smem>>
    %c1 = arith.constant 1 : index
    %1 = memref.load %arg1[%c1] : memref<2xf32, #tpu.memory_space<smem>>
    %c0_0 = arith.constant 0 : index
    %c0_1 = arith.constant 0 : index
    %2 = vector.load %arg2[%c0_0, %c0_1] : memref<2x512xf32, #tpu.memory_space<vmem>>, vector<2x512xf32>
    %3 = vector.broadcast %0 : f32 to vector<2x512xf32>
    %4 = arith.subf %2, %3 : vector<2x512xf32>
    %5 = vector.broadcast %1 : f32 to vector<2x512xf32>
    %6 = arith.mulf %4, %5 : vector<2x512xf32>
    %cst = arith.constant 2.550000e+02 : f32
    %7 = vector.broadcast %cst : f32 to vector<2x512xf32>
    %8 = arith.mulf %6, %7 : vector<2x512xf32>
    %c0_2 = arith.constant 0 : index
    %c0_3 = arith.constant 0 : index
    %9 = vector.load %arg3[%c0_2, %c0_3] : memref<2x512xf32, #tpu.memory_space<vmem>>, vector<2x512xf32>
    tpu.vector_store %arg3[%c0_2, %c0_3], %8 {strides = array<i32>} : memref<2x512xf32, #tpu.memory_space<vmem>>, vector<2x512xf32>,
    return
  }
  func.func @transform_0(%arg0: i32) -> i32 {
    %c0_i32 = arith.constant 0 : i32
    %c0_i32_0 = arith.constant 0 : i32
    return %c0_i32 : i32
  }
  func.func @transform_1(%arg0: i32) -> (i32, i32) {
    %c0_i32 = arith.constant 0 : i32
    %c0_i32_0 = arith.constant 0 : i32
    return %arg0, %c0_i32 : i32, i32
  }
  func.func @transform_2(%arg0: i32) -> (i32, i32) {
    %c0_i32 = arith.constant 0 : i32
    %c0_i32_0 = arith.constant 0 : i32
    return %arg0, %c0_i32 : i32, i32
  }
}

</mosaic_0001>

<llo_original>
// kernel: tpu_custom_call.1
$region0: #{tpu_custom_call.1}
  #allocation0 [shape = 'u32[]', space=smem, size = 0x4, offset = 0x4, fixed_abs, tag = 'smem constant byte address 0x4 - core index']
  #allocation1 [shape = 'u32[144,128]{1,0:T(1,128)}', space=vmem, size = 0x12000, scoped, tag = 'internal scratch']
  %s0 = inlined_call_operand.hbm [shape: f32[2], index: 0, kind: input, shape index: {}]
  %s1 = inlined_call_operand.hbm [shape: f32[2,512], index: 1, kind: input, shape index: {}]
  %s2 = inlined_call_operand.hbm [shape: f32[2,512], index: 2, kind: output, shape index: {}]
  %s3 = sld [smem:[#allocation0]]
  $region26: #{tpu_custom_call.1} parent=0
    _
  %s5 = ssub.s32 1, %s3
  %s6 = scalar_select 0, %s5, %s3
  $region1: #{tpu_custom_call.1} parent=0
    #allocation2 [shape = 'u8[512]{0}', space=smem, size = 0x200, scoped, tag = 'input window, operand 0, single buffered']
    #allocation3 [shape = 's32[1]{0}', space=sflag, size = 0x4, scoped, tag = 'scoped memory for tpu_custom_call.1']
    #allocation4 [shape = 's32[1]{0}', space=sflag, size = 0x4, scoped, tag = 'scoped memory for tpu_custom_call.1']
    #allocation5 [shape = 's32[1]{0}', space=sflag, size = 0x4, scoped, tag = 'scoped memory for tpu_custom_call.1']
    #allocation6 [shape = 'u8[4096]{0}', space=vmem, size = 0x1000, scoped, tag = 'input window, operand 1, single buffered']
    #allocation7 [shape = 'u8[4096]{0}', space=vmem, size = 0x1000, scoped, tag = 'output window, operand 0, single buffered']
    %7 = vsyncpa [#allocation5], 0
    %8 = vsyncpa [#allocation3], 0
    %9 = vsyncpa [#allocation4], 0
    // Predicated region
    $region2: #{tpu_custom_call.1} parent=1 // pred_check
      _
    $region3: #{tpu_custom_call.1} parent=1 // pred_check_branch
      %11 = sbr.rel (0) target = $region5
    $region4: #{tpu_custom_call.1} parent=1 // pred_region
      %s13 = ssub.s32 16, 16
      %14 = vsyncadd [#allocation5], %s13
      %17 = dma.hbm_to_smem %s0, 16, [#allocation2], [#allocation5]
    $region5: #{tpu_custom_call.1} parent=1 // pred_fallthru
      _
    // Predicated region
    $region6: #{tpu_custom_call.1} parent=1 // pred_check
      _
    $region7: #{tpu_custom_call.1} parent=1 // pred_check_branch
      %19 = sbr.rel (0) target = $region9
    $region8: #{tpu_custom_call.1} parent=1 // pred_region
      %s21 = ssub.s32 128, 128
      %22 = vsyncadd [#allocation3], %s21
      %s24 = sshll.u32 [#allocation6], 4
      %s25 = int_to_ptr.vmem [resolvable:$true] %s24
      %27 = dma.hbm_to_vmem [thread:$0]  %s1, 128, %s25, [#allocation3]
    $region9: #{tpu_custom_call.1} parent=1 // pred_fallthru
      _
    // Predicated region
    $region10: #{tpu_custom_call.1} parent=1 // pred_check
      _
    $region11: #{tpu_custom_call.1} parent=1 // pred_check_branch
      %29 = sbr.rel (0) target = $region13
    $region12: #{tpu_custom_call.1} parent=1 // pred_region
      %30 = dma.done [#allocation5], 16
    $region13: #{tpu_custom_call.1} parent=1 // pred_fallthru
      _
    // Predicated region
    $region14: #{tpu_custom_call.1} parent=1 // pred_check
      _
    $region15: #{tpu_custom_call.1} parent=1 // pred_check_branch
      %32 = sbr.rel (0) target = $region17
    $region16: #{tpu_custom_call.1} parent=1 // pred_region
      %33 = dma.done [#allocation3], 128
    $region17: #{tpu_custom_call.1} parent=1 // pred_fallthru
      _
    %34 = sfence
    %s35 = sld [smem:[#allocation2]]
    %s36 = sld [smem:[#allocation2 + $0x1]]
    %v37 = vld [vmem:[#allocation6] sm:$0xff]
    %v38 = vstv %s35
    %v39 = vsub.f32 %v37, %v38
    %v40 = vstv %s36
    %v41 = vmul.f32 %v39, %v40
    %v42 = vmul.f32 %v41, 255.0
    %43 = vst [vmem:[#allocation7] sm:$0xff] %v42
    // Predicated region
    $region18: #{tpu_custom_call.1} parent=1 // pred_check
      _
    $region19: #{tpu_custom_call.1} parent=1 // pred_check_branch
      %45 = sbr.rel (0) target = $region21
    $region20: #{tpu_custom_call.1} parent=1 // pred_region
      %s47 = ssub.s32 128, 128
      %48 = vsyncadd [#allocation4], %s47
      %s50 = sshll.u32 [#allocation7], 4
      %s51 = int_to_ptr.vmem [resolvable:$true] %s50
      %53 = dma.vmem_to_hbm [thread:$0]  %s51, 128, %s2, [#allocation4]
    $region21: #{tpu_custom_call.1} parent=1 // pred_fallthru
      _
    // Predicated region
    $region22: #{tpu_custom_call.1} parent=1 // pred_check
      _
    $region23: #{tpu_custom_call.1} parent=1 // pred_check_branch
      %55 = sbr.rel (0) target = $region25
    $region24: #{tpu_custom_call.1} parent=1 // pred_region
      %56 = dma.done [#allocation4], 128
    $region25: #{tpu_custom_call.1} parent=1 // pred_fallthru
      _
    %57 = vsyncpa [#allocation3], 1
    %58 = vsyncpa [#allocation4], 1
    %59 = vsyncpa [#allocation5], 1

</llo_original>
